<compile_context>
chip_gen: v6e
topology: v6e:2x2x1
jax: 0.10.0
libtpu: 0.0.40
codegen_flags: <defaults>
</compile_context>

<pallas_src>
import jax
import jax.numpy as jnp
from jax import lax
from jax.experimental import pallas as pl
from jax.experimental.pallas import tpu as pltpu


_ROWS_PER_BLOCK = 512   # cap on sequence positions per grid step (VMEM bound)


def _convlstm_kernel(xp_ref, w_ref, pc_ref, out_ref):
    """One (batch element, L-block) grid step.

    xp_ref : (Lp, C1)    channel-last [input ; prev_hidden ; ones], zero padded
                         by (K-1)//2 halo rows; resident across the L axis.
    w_ref  : (K, C1, 4H) tap-major conv weight, bias folded into the
                         ones-channel row of the centre tap.
    pc_ref : (tL, H)     previous cell state for this L-block.
    out_ref: (tL, 4H)    lane-dense output: [0:H)=hidden, [H:2H)=cell, rest 0.
    """
    K, C1, four_h = w_ref.shape
    t_l = out_ref.shape[0]
    H = pc_ref.shape[1]

    off = pl.multiple_of(pl.program_id(1) * t_l, 8)

    # 'same' conv1d as K shifted dot-accumulations on the MXU (f32 accumulate).
    gates = jnp.zeros((t_l, four_h), jnp.float32)
    for k in range(K):                                   # K is small & static
        xk = xp_ref[pl.ds(off + k, t_l), :]              # (tL, C1)
        gates = gates + jnp.dot(xk, w_ref[k],
                                preferred_element_type=jnp.float32)

    # Full-width activations (EUP has its own slot) + one lane-mask select.
    # Gate column order matches torch chunk(4,1): [in, remember, out, cell].
    lane = lax.broadcasted_iota(jnp.int32, (t_l, four_h), 1)
    act = jnp.where(lane < 3 * H, jax.nn.sigmoid(gates), jnp.tanh(gates))

    # XLU rolls align each H-lane gate segment onto lanes [0:H); no sub-vreg
    # slicing of the 128-lane gates vreg.
    ic = act * pltpu.roll(act, shift=H, axis=1)          # [0:H) = sig(i)*tanh(c)
    rg = pltpu.roll(act, shift=3 * H, axis=1)            # [0:H) = sig(r)
    og = pltpu.roll(act, shift=2 * H, axis=1)            # [0:H) = sig(o)

    # prev_cell widened once to the full lane width (zeros beyond H).
    pc = jnp.concatenate(
        [pc_ref[...].astype(jnp.float32),
         jnp.zeros((t_l, four_h - H), jnp.float32)], axis=1)

    cell = rg * pc + ic                                  # [0:H) = new cell
    hidden = og * jnp.tanh(cell)                         # [0:H) = new hidden

    # Lane-dense epilogue: one full-width unmasked store [hidden ; cell ; 0].
    out = jnp.where(lane < H, hidden, 0.0) + jnp.where(
        (lane >= H) & (lane < 2 * H),
        pltpu.roll(cell, shift=H, axis=1), 0.0)
    out_ref[...] = out.astype(out_ref.dtype)


def convlstm1d_forward(input_, prev_state, weight, bias, kernel_size=3):
    """ConvLSTM1d forward.

    input_     : (B, C_in, L)         float32 (PyTorch NCL layout)
    prev_state : None or (prev_hidden, prev_cell), each (B, H, L)
    weight     : (4H, C_in + H, K)    (PyTorch Conv1d weight layout)
    bias       : (4H,)
    returns    : (hidden, cell), each (B, H, L)
    """
    B, C_in, L = input_.shape
    four_h, C_tot, K = weight.shape
    H = four_h // 4
    assert C_tot == C_in + H and K == kernel_size
    # 'same' padding below matches torch Conv1d(padding=(K-1)//2) for odd K only
    assert K % 2 == 1, "kernel_size must be odd to match the module's padding"
    pad = (K - 1) // 2

    if prev_state is None:
        prev_hidden = jnp.zeros((B, H, L), input_.dtype)
        prev_cell = jnp.zeros((B, H, L), input_.dtype)
    else:
        prev_hidden, prev_cell = prev_state

    # ---- L tiling: many moderate blocks (bounded VMEM + pipeline depth) ----
    n_l = max(1, pl.cdiv(L, _ROWS_PER_BLOCK))
    t_l = ((pl.cdiv(L, n_l) + 7) // 8) * 8               # 8-sublane granule
    l_pad = n_l * t_l                                    # aligned output length
    l_full = l_pad + K - 1                               # + conv halo rows

    C1 = C_tot + 1                                       # +1 ones-channel (bias)

    # ---- glue (once, outside the kernel): channel-last stacked input -------
    stacked = jnp.concatenate([input_, prev_hidden], axis=1)        # (B, C, L)
    x_lc = jnp.transpose(stacked, (0, 2, 1)).astype(jnp.float32)    # (B, L, C)
    x_lc = jnp.concatenate([x_lc, jnp.ones((B, L, 1), jnp.float32)], axis=2)
    xp = jnp.pad(x_lc, ((0, 0), (pad, l_full - pad - L), (0, 0)))   # (B, Lf, C1)

    # weight (4H, C, K) -> (K, C, 4H); bias goes in the ones-channel row of the
    # centre tap only (added exactly once per output position).
    w_t = jnp.transpose(weight, (2, 1, 0)).astype(jnp.float32)      # (K, C, 4H)
    bias_rows = jnp.zeros((K, 1, four_h), jnp.float32)
    bias_rows = bias_rows.at[pad, 0, :].set(bias.astype(jnp.float32))
    w_unf = jnp.concatenate([w_t, bias_rows], axis=1)               # (K, C1, 4H)

    pc_lc = jnp.transpose(prev_cell, (0, 2, 1)).astype(jnp.float32)  # (B, L, H)
    pc_lc = jnp.pad(pc_lc, ((0, 0), (0, l_pad - L), (0, 0)))         # (B, Lp, H)

    # ---- explicit VMEM budget (double-buffered tiles + epilogue temps) -----
    est_bytes = 4 * (2 * l_full * C1 + 2 * K * C1 * four_h
                     + 2 * t_l * H + 2 * t_l * four_h + 12 * t_l * four_h)
    vmem_limit = int(min(48 * 2**20, max(16 * 2**20, 2 * est_bytes)))

    grid_spec = pltpu.PrefetchScalarGridSpec(
        num_scalar_prefetch=0,
        grid=(B, n_l),
        in_specs=[
            # full padded sequence for this batch element; index_map ignores l
            # so the tile stays resident across the L-block axis (one DMA / b).
            pl.BlockSpec((None, l_full, C1), lambda b, l: (b, 0, 0)),
            pl.BlockSpec((K, C1, four_h), lambda b, l: (0, 0, 0)),
            pl.BlockSpec((None, t_l, H), lambda b, l: (b, l, 0)),
        ],
        out_specs=pl.BlockSpec((None, t_l, four_h), lambda b, l: (b, l, 0)),
    )

    out = pl.pallas_call(
        _convlstm_kernel,
        out_shape=jax.ShapeDtypeStruct((B, l_pad, four_h), jnp.float32),
        grid_spec=grid_spec,
        compiler_params=pltpu.CompilerParams(
            dimension_semantics=("parallel", "arbitrary"),
            vmem_limit_bytes=vmem_limit),
    )(xp, w_unf, pc_lc)

    # unpack the lane-dense [hidden ; cell ; zeros] block, restore NCL layout
    hidden = jnp.transpose(out[:, :L, :H], (0, 2, 1)).astype(input_.dtype)
    cell = jnp.transpose(out[:, :L, H:2 * H], (0, 2, 1)).astype(input_.dtype)
    return hidden, cell


def _reference_forward(input_, prev_state, weight, bias, kernel_size=3):
    """Pure-JAX reference (mirrors torch semantics) for correctness check."""
    B, C_in, L = input_.shape
    four_h = weight.shape[0]
    H = four_h // 4
    pad = (kernel_size - 1) // 2
    if prev_state is None:
        prev_hidden = jnp.zeros((B, H, L), input_.dtype)
        prev_cell = jnp.zeros((B, H, L), input_.dtype)
    else:
        prev_hidden, prev_cell = prev_state
    stacked = jnp.concatenate([input_, prev_hidden], axis=1)        # (B, C, L)
    gates = jax.lax.conv_general_dilated(
        stacked, weight, window_strides=(1,), padding=[(pad, pad)],
        dimension_numbers=("NCH", "OIH", "NCH"))
    gates = gates + bias[None, :, None]
    i_g, r_g, o_g, c_g = jnp.split(gates, 4, axis=1)
    i_g = jax.nn.sigmoid(i_g)
    r_g = jax.nn.sigmoid(r_g)
    o_g = jax.nn.sigmoid(o_g)
    c_g = jnp.tanh(c_g)
    cell = r_g * prev_cell + i_g * c_g
    hidden = o_g * jnp.tanh(cell)
    return hidden, cell


if __name__ == "__main__":
    # Small shapes consistent with the module's forward.
    B, C_in, H, L, K = 2, 4, 32, 16, 3

    key = jax.random.PRNGKey(0)
    k_x, k_h, k_c, k_w, k_b = jax.random.split(key, 5)

    x = jax.random.normal(k_x, (B, C_in, L), dtype=jnp.float32)
    prev_hidden = jax.random.normal(k_h, (B, H, L), dtype=jnp.float32)
    prev_cell = jax.random.normal(k_c, (B, H, L), dtype=jnp.float32)

    # Deterministic synthetic Conv1d parameters (shapes from torch.nn.Conv1d).
    fan_in = (C_in + H) * K
    bound = 1.0 / jnp.sqrt(jnp.float32(fan_in))
    weight = jax.random.uniform(
        k_w, (4 * H, C_in + H, K), minval=-bound, maxval=bound,
        dtype=jnp.float32)
    bias = jax.random.uniform(
        k_b, (4 * H,), minval=-bound, maxval=bound, dtype=jnp.float32)

    hidden, cell = convlstm1d_forward(x, (prev_hidden, prev_cell),
                                      weight, bias, kernel_size=K)
    jax.block_until_ready((hidden, cell))

    hidden_ref, cell_ref = _reference_forward(x, (prev_hidden, prev_cell),
                                              weight, bias, kernel_size=K)
    assert jnp.allclose(hidden, hidden_ref, atol=1e-5, rtol=1e-5)
    assert jnp.allclose(cell, cell_ref, atol=1e-5, rtol=1e-5)

    # Also exercise the prev_state=None branch (zeros init), like the module.
    h0, c0 = convlstm1d_forward(x, None, weight, bias, kernel_size=K)
    jax.block_until_ready((h0, c0))
    h0_ref, c0_ref = _reference_forward(x, None, weight, bias, kernel_size=K)
    assert jnp.allclose(h0, h0_ref, atol=1e-5, rtol=1e-5)
    assert jnp.allclose(c0, c0_ref, atol=1e-5, rtol=1e-5)

    print("KERNEL_OK")
</pallas_src>

<mosaic_0001>
module attributes {stable_mosaic.version = 11 : i64} {
  func.func @_convlstm_kernel(%arg0: i32, %arg1: i32, %arg2: memref<1x18x37xf32, #tpu.memory_space<vmem>>, %arg3: memref<3x37x128xf32, #tpu.memory_space<vmem>>, %arg4: memref<1x16x32xf32, #tpu.memory_space<vmem>>, %arg5: memref<1x16x128xf32, #tpu.memory_space<vmem>>) attributes {dimension_semantics = [#tpu.dimension_semantics<parallel>, #tpu.dimension_semantics<arbitrary>], iteration_bounds = array<i64: 2, 1>, scalar_prefetch = 0 : i64, scratch_operands = 0 : i64, tpu.core_type = #tpu.core_type<tc>, window_params = [{transform_indices = @transform_0, window_bounds = array<i64: 1, 18, 37>}, {pipeline_mode = #tpu.pipeline_mode<synchronous>, transform_indices = @transform_1, window_bounds = array<i64: 3, 37, 128>}, {transform_indices = @transform_2, window_bounds = array<i64: 1, 16, 32>}, {transform_indices = @transform_3, window_bounds = array<i64: 1, 16, 128>}]} {
    %c16_i32 = arith.constant 16 : i32
    %0 = arith.muli %arg1, %c16_i32 : i32
    %1 = tpu.assume_multiple %0, 8 : i32
    %cst = arith.constant 0.000000e+00 : f32
    %2 = vector.broadcast %cst : f32 to vector<16x128xf32>
    %c0_i32 = arith.constant 0 : i32
    %3 = arith.addi %1, %c0_i32 : i32
    %c0 = arith.constant 0 : index
    %4 = arith.index_cast %3 : i32 to index
    %c0_0 = arith.constant 0 : index
    %5 = vector.load %arg2[%c0, %4, %c0_0] : memref<1x18x37xf32, #tpu.memory_space<vmem>>, vector<1x16x37xf32>
    %6 = vector.shape_cast %5 : vector<1x16x37xf32> to vector<16x37xf32>
    %c0_1 = arith.constant 0 : index
    %c0_2 = arith.constant 0 : index
    %c0_3 = arith.constant 0 : index
    %7 = vector.load %arg3[%c0_1, %c0_2, %c0_3] : memref<3x37x128xf32, #tpu.memory_space<vmem>>, vector<1x37x128xf32>
    %8 = vector.shape_cast %7 : vector<1x37x128xf32> to vector<37x128xf32>
    %cst_4 = arith.constant dense<0.000000e+00> : vector<16x128xf32>
    %9 = tpu.matmul %6, %8, %cst_4 {dimension_numbers = #tpu.dot_dimension_numbers<[1], [0], [0], [1], [0, 0, 1, 1], [], []>} : vector<16x37xf32>, vector<37x128xf32>, vector<16x128xf32> -> vector<16x128xf32>
    %10 = arith.addf %2, %9 : vector<16x128xf32>
    %c1_i32 = arith.constant 1 : i32
    %11 = arith.addi %1, %c1_i32 : i32
    %c0_5 = arith.constant 0 : index
    %12 = arith.index_cast %11 : i32 to index
    %c0_6 = arith.constant 0 : index
    %13 = vector.load %arg2[%c0_5, %12, %c0_6] : memref<1x18x37xf32, #tpu.memory_space<vmem>>, vector<1x16x37xf32>
    %14 = vector.shape_cast %13 : vector<1x16x37xf32> to vector<16x37xf32>
    %c1 = arith.constant 1 : index
    %c0_7 = arith.constant 0 : index
    %c0_8 = arith.constant 0 : index
    %15 = vector.load %arg3[%c1, %c0_7, %c0_8] : memref<3x37x128xf32, #tpu.memory_space<vmem>>, vector<1x37x128xf32>
    %16 = vector.shape_cast %15 : vector<1x37x128xf32> to vector<37x128xf32>
    %cst_9 = arith.constant dense<0.000000e+00> : vector<16x128xf32>
    %17 = tpu.matmul %14, %16, %cst_9 {dimension_numbers = #tpu.dot_dimension_numbers<[1], [0], [0], [1], [0, 0, 1, 1], [], []>} : vector<16x37xf32>, vector<37x128xf32>, vector<16x128xf32> -> vector<16x128xf32>
    %18 = arith.addf %10, %17 : vector<16x128xf32>
    %c2_i32 = arith.constant 2 : i32
    %19 = arith.addi %1, %c2_i32 : i32
    %c0_10 = arith.constant 0 : index
    %20 = arith.index_cast %19 : i32 to index
    %c0_11 = arith.constant 0 : index
    %21 = vector.load %arg2[%c0_10, %20, %c0_11] : memref<1x18x37xf32, #tpu.memory_space<vmem>>, vector<1x16x37xf32>
    %22 = vector.shape_cast %21 : vector<1x16x37xf32> to vector<16x37xf32>
    %c2 = arith.constant 2 : index
    %c0_12 = arith.constant 0 : index
    %c0_13 = arith.constant 0 : index
    %23 = vector.load %arg3[%c2, %c0_12, %c0_13] : memref<3x37x128xf32, #tpu.memory_space<vmem>>, vector<1x37x128xf32>
    %24 = vector.shape_cast %23 : vector<1x37x128xf32> to vector<37x128xf32>
    %cst_14 = arith.constant dense<0.000000e+00> : vector<16x128xf32>
    %25 = tpu.matmul %22, %24, %cst_14 {dimension_numbers = #tpu.dot_dimension_numbers<[1], [0], [0], [1], [0, 0, 1, 1], [], []>} : vector<16x37xf32>, vector<37x128xf32>, vector<16x128xf32> -> vector<16x128xf32>
    %26 = arith.addf %18, %25 : vector<16x128xf32>
    %27 = tpu.iota {dimensions = array<i32: 1>} : vector<16x128xi32>
    %c96_i32 = arith.constant 96 : i32
    %28 = vector.broadcast %c96_i32 : i32 to vector<16x128xi32>
    %29 = arith.cmpi slt, %27, %28 : vector<16x128xi32>
    %30 = arith.negf %26 : vector<16x128xf32>
    %31 = math.exp %30 : vector<16x128xf32>
    %cst_15 = arith.constant 1.000000e+00 : f32
    %32 = vector.broadcast %cst_15 : f32 to vector<16x128xf32>
    %33 = arith.addf %32, %31 : vector<16x128xf32>
    %34 = arith.divf %32, %33 : vector<16x128xf32>
    %35 = math.tanh %26 : vector<16x128xf32>
    %36 = arith.select %29, %34, %35 : vector<16x128xi1>, vector<16x128xf32>
    %c32_i32 = arith.constant 32 : i32
    %37 = tpu.dynamic_rotate %36 by %c32_i32 dim 1 : vector<16x128xf32>, i32 -> vector<16x128xf32>
    %38 = arith.mulf %36, %37 : vector<16x128xf32>
    %c96_i32_16 = arith.constant 96 : i32
    %39 = tpu.dynamic_rotate %36 by %c96_i32_16 dim 1 : vector<16x128xf32>, i32 -> vector<16x128xf32>
    %c64_i32 = arith.constant 64 : i32
    %40 = tpu.dynamic_rotate %36 by %c64_i32 dim 1 : vector<16x128xf32>, i32 -> vector<16x128xf32>
    %c0_17 = arith.constant 0 : index
    %c0_18 = arith.constant 0 : index
    %c0_19 = arith.constant 0 : index
    %41 = vector.load %arg4[%c0_17, %c0_18, %c0_19] : memref<1x16x32xf32, #tpu.memory_space<vmem>>, vector<1x16x32xf32>
    %42 = vector.shape_cast %41 : vector<1x16x32xf32> to vector<16x32xf32>
    %cst_20 = arith.constant 0.000000e+00 : f32
    %43 = vector.broadcast %cst_20 : f32 to vector<16x96xf32>
    %44 = tpu.concatenate %42, %43 in 1 : vector<16x32xf32>, vector<16x96xf32> -> vector<16x128xf32>
    %45 = arith.mulf %39, %44 : vector<16x128xf32>
    %46 = arith.addf %45, %38 : vector<16x128xf32>
    %47 = math.tanh %46 : vector<16x128xf32>
    %48 = arith.mulf %40, %47 : vector<16x128xf32>
    %c32_i32_21 = arith.constant 32 : i32
    %49 = vector.broadcast %c32_i32_21 : i32 to vector<16x128xi32>
    %50 = arith.cmpi slt, %27, %49 : vector<16x128xi32>
    %cst_22 = arith.constant 0.000000e+00 : f32
    %51 = vector.broadcast %cst_22 : f32 to vector<16x128xf32>
    %52 = arith.select %50, %48, %51 : vector<16x128xi1>, vector<16x128xf32>
    %c32_i32_23 = arith.constant 32 : i32
    %53 = vector.broadcast %c32_i32_23 : i32 to vector<16x128xi32>
    %54 = arith.cmpi sge, %27, %53 : vector<16x128xi32>
    %c64_i32_24 = arith.constant 64 : i32
    %55 = vector.broadcast %c64_i32_24 : i32 to vector<16x128xi32>
    %56 = arith.cmpi slt, %27, %55 : vector<16x128xi32>
    %57 = arith.andi %54, %56 : vector<16x128xi1>
    %c32_i32_25 = arith.constant 32 : i32
    %58 = tpu.dynamic_rotate %46 by %c32_i32_25 dim 1 : vector<16x128xf32>, i32 -> vector<16x128xf32>
    %cst_26 = arith.constant 0.000000e+00 : f32
    %59 = vector.broadcast %cst_26 : f32 to vector<16x128xf32>
    %60 = arith.select %57, %58, %59 : vector<16x128xi1>, vector<16x128xf32>
    %61 = arith.addf %52, %60 : vector<16x128xf32>
    %c0_27 = arith.constant 0 : index
    %c0_28 = arith.constant 0 : index
    %c0_29 = arith.constant 0 : index
    %62 = vector.load %arg5[%c0_27, %c0_28, %c0_29] : memref<1x16x128xf32, #tpu.memory_space<vmem>>, vector<1x16x128xf32>
    %63 = vector.shape_cast %62 : vector<1x16x128xf32> to vector<16x128xf32>
    %64 = vector.shape_cast %61 : vector<16x128xf32> to vector<1x16x128xf32>
    tpu.vector_store %arg5[%c0_27, %c0_28, %c0_29], %64 {strides = array<i32>} : memref<1x16x128xf32, #tpu.memory_space<vmem>>, vector<1x16x128xf32>,
    return
  }
  func.func @transform_0(%arg0: i32, %arg1: i32) -> (i32, i32, i32) {
    %c0_i32 = arith.constant 0 : i32
    %c0_i32_0 = arith.constant 0 : i32
    %c0_i32_1 = arith.constant 0 : i32
    return %arg0, %c0_i32, %c0_i32_0 : i32, i32, i32
  }
  func.func @transform_1(%arg0: i32, %arg1: i32) -> (i32, i32, i32) {
    %c0_i32 = arith.constant 0 : i32
    %c0_i32_0 = arith.constant 0 : i32
    %c0_i32_1 = arith.constant 0 : i32
    %c0_i32_2 = arith.constant 0 : i32
    return %c0_i32, %c0_i32_0, %c0_i32_1 : i32, i32, i32
  }
  func.func @transform_2(%arg0: i32, %arg1: i32) -> (i32, i32, i32) {
    %c0_i32 = arith.constant 0 : i32
    %c0_i32_0 = arith.constant 0 : i32
    return %arg0, %arg1, %c0_i32 : i32, i32, i32
  }
  func.func @transform_3(%arg0: i32, %arg1: i32) -> (i32, i32, i32) {
    %c0_i32 = arith.constant 0 : i32
    %c0_i32_0 = arith.constant 0 : i32
    return %arg0, %arg1, %c0_i32 : i32, i32, i32
  }
}

</mosaic_0001>

<llo_original>
// kernel: tpu_custom_call.1
$region0: #{tpu_custom_call.1}
  #allocation0 [shape = 'u32[]', space=smem, size = 0x4, offset = 0x4, fixed_abs, tag = 'smem constant byte address 0x4 - core index']
  #allocation1 [shape = 'u32[144,128]{1,0:T(1,128)}', space=vmem, size = 0x12000, scoped, tag = 'internal scratch']
  %s0 = inlined_call_operand.vmem [shape: f32[2,18,37], index: 0, kind: input, shape index: {}]
  %s1 = inlined_call_operand.hbm [shape: f32[3,37,128], index: 1, kind: input, shape index: {}]
  %s2 = inlined_call_operand.vmem [shape: f32[2,16,32], index: 2, kind: input, shape index: {}]
  %s3 = inlined_call_operand.hbm [shape: f32[2,16,128], index: 3, kind: output, shape index: {}]
  %s4 = sld [smem:[#allocation0]]
  $region49: #{tpu_custom_call.1} parent=0
    _
  %s6 = ssub.s32 1, %s4
  %s7 = scalar_select 0, %s6, %s4
  $region1: #{tpu_custom_call.1} parent=0
    #allocation2 [shape = 'u8[61440]{0}', space=vmem, size = 0xf000, scoped, tag = 'input window, operand 1, single buffered']
    #allocation3 [shape = 's32[2]{0}', space=sflag, size = 0x8, scoped, tag = 'scoped memory for tpu_custom_call.1']
    #allocation4 [shape = 's32[2]{0}', space=sflag, size = 0x8, scoped, tag = 'scoped memory for tpu_custom_call.1']
    #allocation5 [shape = 'u8[16384]{0}', space=vmem, size = 0x4000, scoped, tag = 'output window, operand 0']
    %8 = vsyncpa [#allocation3], 0
    %9 = vsyncpa [#allocation4], 0
    %s10 = scalar_lea.sflag [#allocation4], 1
    %11 = vsyncpa %s10, 0
    loop: start=0, step=1, limit=4
    $region2: #{tpu_custom_call.1} parent=1 // loop_pre_header
      _
    $region3: #{tpu_custom_call.1} parent=1 // loop_header
      %s13 = sphi 0, %s17
      %p14 = scmp.ge.s32.totalorder %s13, 4
      %s20 = sphi 0, %s32
      %s21 = sphi 0, %s28
      %s22 = sphi 0, %s20
      %s23 = sphi 0, %s21
      %s24 = sphi 0, %s22
      %s25 = sphi 0, %s23
      %s35 = sphi 0, %s37
      %s38 = sphi 0, %s35
      %s39 = sphi 0, %s38
      %s55 = sphi 0, %s39
      %s59 = sphi 0, %s59
      %s61 = sphi 0, %s59
      %s62 = sphi 0, %s61
      %s76 = sphi 0, %s62
      %s84 = sphi 0, %s86
      %s87 = sphi 0, %s84
      %s88 = sphi 0, %s87
      %s104 = sphi 0, %s88
      %s112 = sphi 0, %s114
      %s115 = sphi 0, %s112
      %s116 = sphi 0, %s115
      %s132 = sphi 0, %s116
    $region4: #{tpu_custom_call.1} parent=1 // loop_header_branch
      %16 = sbr.rel (%p14) target = $region8
    $region5: #{tpu_custom_call.1} parent=1 // loop_body
      %s18 = ssub.s32 %s13, 1
      %s19 = ssub.s32 %s13, 2
      %s26 = sadd.s32 1, %s21
      %p27 = scmp.ge.s32.totalorder %s26, 1
      %s28 = scalar_select %p27, 0, %s26
      %s29 = sadd.s32 1, %s20
      %s30 = scalar_select %p27, %s29, %s20
      %p31 = scmp.ge.s32.totalorder %s30, 2
      %s32 = scalar_select %p31, 0, %s30
      %s33 = ssub.s32 %s20, %s32
      %p34 = scmp.eq.s32.totalorder %s33, 0
      %s36 = sadd.s32 %s35, 1
      %s37 = scalar_select %p34, %s35, %s36
      %p40 = pneg %p34
      %p41 = scmp.eq.s32.totalorder %s13, 1
      %p42 = por %p40, %p41
      %p43 = scmp.ne.s32.totalorder %s35, %s38
      %p44 = scmp.eq.s32.totalorder %s13, 0
      %p45 = por %p43, %p44
      %p46 = scmp.ne.s32.totalorder %s35, %s38
      %p47 = scmp.eq.s32.totalorder %s18, 1
      %p48 = por %p46, %p47
      %p49 = scmp.ne.s32.totalorder %s38, %s39
      %p50 = scmp.eq.s32.totalorder %s18, 0
      %p51 = por %p49, %p50
      %p52 = scmp.ne.s32.totalorder %s38, %s39
      %p53 = scmp.eq.s32.totalorder %s19, 1
      %p54 = por %p52, %p53
      %p56 = scmp.ne.s32.totalorder %s39, %s55
      %p57 = scmp.eq.s32.totalorder %s19, 0
      %p58 = por %p56, %p57
      %s60 = sadd.s32 %s59, 1
      %p63 = scmp.eq.s32.totalorder %s13, 1
      %p64 = scmp.ne.s32.totalorder %s59, %s61
      %p65 = scmp.eq.s32.totalorder %s13, 0
      %p66 = por %p64, %p65
      %p67 = scmp.ne.s32.totalorder %s59, %s61
      %p68 = scmp.eq.s32.totalorder %s18, 1
      %p69 = por %p67, %p68
      %p70 = scmp.ne.s32.totalorder %s61, %s62
      %p71 = scmp.eq.s32.totalorder %s18, 0
      %p72 = por %p70, %p71
      %p73 = scmp.ne.s32.totalorder %s61, %s62
      %p74 = scmp.eq.s32.totalorder %s19, 1
      %p75 = por %p73, %p74
      %p77 = scmp.ne.s32.totalorder %s62, %s76
      %p78 = scmp.eq.s32.totalorder %s19, 0
      %p79 = por %p77, %p78
      %s80 = ssub.s32 %s20, %s32
      %s81 = ssub.s32 %s21, %s28
      %s82 = sor.u32 %s80, %s81
      %p83 = scmp.eq.s32.totalorder %s82, 0
      %s85 = sadd.s32 %s84, 1
      %s86 = scalar_select %p83, %s84, %s85
      %p89 = pneg %p83
      %p90 = scmp.eq.s32.totalorder %s13, 1
      %p91 = por %p89, %p90
      %p92 = scmp.ne.s32.totalorder %s84, %s87
      %p93 = scmp.eq.s32.totalorder %s13, 0
      %p94 = por %p92, %p93
      %p95 = scmp.ne.s32.totalorder %s84, %s87
      %p96 = scmp.eq.s32.totalorder %s18, 1
      %p97 = por %p95, %p96
      %p98 = scmp.ne.s32.totalorder %s87, %s88
      %p99 = scmp.eq.s32.totalorder %s18, 0
      %p100 = por %p98, %p99
      %p101 = scmp.ne.s32.totalorder %s87, %s88
      %p102 = scmp.eq.s32.totalorder %s19, 1
      %p103 = por %p101, %p102
      %p105 = scmp.ne.s32.totalorder %s88, %s104
      %p106 = scmp.eq.s32.totalorder %s19, 0
      %p107 = por %p105, %p106
      %s108 = ssub.s32 %s20, %s32
      %s109 = ssub.s32 %s21, %s28
      %s110 = sor.u32 %s108, %s109
      %p111 = scmp.eq.s32.totalorder %s110, 0
      %s113 = sadd.s32 %s112, 1
      %s114 = scalar_select %p111, %s112, %s113
      %p117 = pneg %p111
      %p118 = scmp.eq.s32.totalorder %s13, 1
      %p119 = por %p117, %p118
      %p120 = scmp.ne.s32.totalorder %s112, %s115
      %p121 = scmp.eq.s32.totalorder %s13, 0
      %p122 = por %p120, %p121
      %p123 = scmp.ne.s32.totalorder %s112, %s115
      %p124 = scmp.eq.s32.totalorder %s18, 1
      %p125 = por %p123, %p124
      %p126 = scmp.ne.s32.totalorder %s115, %s116
      %p127 = scmp.eq.s32.totalorder %s18, 0
      %p128 = por %p126, %p127
      %p129 = scmp.ne.s32.totalorder %s115, %s116
      %p130 = scmp.eq.s32.totalorder %s19, 1
      %p131 = por %p129, %p130
      %p133 = scmp.ne.s32.totalorder %s116, %s132
      %p134 = scmp.eq.s32.totalorder %s19, 0
      %p135 = por %p133, %p134
      %p136 = scmp.le.s32.totalorder 1, %s13
      %p137 = scmp.lt.s32.totalorder %s13, 3
      %p138 = pnand %p136, %p137
      %p139 = pneg %p138
      // Predicated region
      $region9: #{tpu_custom_call.1} parent=5 // pred_check
        _
      $region10: #{tpu_custom_call.1} parent=5 // pred_check_branch
        %141 = sbr.rel (%p138) target = $region12
      $region11: #{tpu_custom_call.1} parent=5 // pred_region
        %s142 = ssub.s32 %s13, 1
        // Predicated region
        $region13: #{tpu_custom_call.1} parent=11 // pred_check
          %p143 = pneg %p72
        $region14: #{tpu_custom_call.1} parent=11 // pred_check_branch
          %145 = sbr.rel (%p143) target = $region16
        $region15: #{tpu_custom_call.1} parent=11 // pred_region
          %s147 = ssub.s32 1920, 1920
          %148 = vsyncadd [#allocation3], %s147
          %s149 = sshll.u32 [#allocation2], 4
          %s150 = int_to_ptr.vmem [resolvable:$true] %s149
          %155 = dma.hbm_to_vmem [thread:$0]  %s1, 1920, %s150, [#allocation3], 128, 128, 8
        $region16: #{tpu_custom_call.1} parent=11 // pred_fallthru
          _
      $region12: #{tpu_custom_call.1} parent=5 // pred_fallthru
        _
      %p156 = scmp.lt.s32.totalorder %s13, 2
      // Predicated region
      $region17: #{tpu_custom_call.1} parent=5 // pred_check
        %p157 = pneg %p156
      $region18: #{tpu_custom_call.1} parent=5 // pred_check_branch
        %159 = sbr.rel (%p157) target = $region20
      $region19: #{tpu_custom_call.1} parent=5 // pred_region
        // Predicated region
        $region21: #{tpu_custom_call.1} parent=19 // pred_check
          %p160 = pneg %p45
        $region22: #{tpu_custom_call.1} parent=19 // pred_check_branch
          %162 = sbr.rel (%p160) target = $region24
        $region23: #{tpu_custom_call.1} parent=19 // pred_region
          %p163 = scmp.lt.s32.totalorder %s20, 1
          %s164 = scalar_select %p163, %s20, 1
          %s165 = smul.addr %s164, 3
          %s166 = smul.addr %s165, 8
          %s167 = scalar_lea.vmem %s0, %s166
        $region24: #{tpu_custom_call.1} parent=19 // pred_fallthru
          _
        // Predicated region
        $region25: #{tpu_custom_call.1} parent=19 // pred_check
          %p168 = pneg %p94
        $region26: #{tpu_custom_call.1} parent=19 // pred_check_branch
          %170 = sbr.rel (%p168) target = $region28
        $region27: #{tpu_custom_call.1} parent=19 // pred_region
          %s171 = smul.u32 2, %s21
          %p172 = scmp.lt.s32.totalorder %s20, 1
          %s173 = scalar_select %p172, %s20, 1
          %p174 = scmp.lt.s32.totalorder %s171, 1
          %s175 = scalar_select %p174, %s171, 1
          %s176 = smul.addr %s173, 2
          %s177 = sadd.s32 %s175, %s176
          %s178 = smul.addr %s177, 8
          %s179 = scalar_lea.vmem %s2, %s178
          %s180 = smul.u32 2, %s21
        $region28: #{tpu_custom_call.1} parent=19 // pred_fallthru
          _
      $region20: #{tpu_custom_call.1} parent=5 // pred_fallthru
        _
      %p181 = scmp.le.s32.totalorder 1, %s13
      %p182 = scmp.lt.s32.totalorder %s13, 3
      %p183 = pnand %p181, %p182
      %p184 = pneg %p183
      // Predicated region
      $region29: #{tpu_custom_call.1} parent=5 // pred_check
        _
      $region30: #{tpu_custom_call.1} parent=5 // pred_check_branch
        %186 = sbr.rel (%p183) target = $region32
      $region31: #{tpu_custom_call.1} parent=5 // pred_region
        %s187 = ssub.s32 %s13, 1
        // Predicated region
        $region33: #{tpu_custom_call.1} parent=31 // pred_check
          %p188 = pneg %p72
        $region34: #{tpu_custom_call.1} parent=31 // pred_check_branch
          %190 = sbr.rel (%p188) target = $region36
        $region35: #{tpu_custom_call.1} parent=31 // pred_region
          %191 = dma.done [#allocation3], 1920
        $region36: #{tpu_custom_call.1} parent=31 // pred_fallthru
          _
        %p192 = scmp.lt.s32.totalorder %s22, 1
        %s193 = scalar_select %p192, %s22, 1
        %s194 = smul.addr %s193, 3
        %s195 = smul.addr %s194, 8
        %s196 = scalar_lea.vmem %s0, %s195
        %p197 = pneg %p51
        %p198 = pneg %p48
        %p199 = pneg %p72
        %p200 = pneg %p69
        %s201 = smul.u32 2, %s23
        %p202 = scmp.lt.s32.totalorder %s22, 1
        %s203 = scalar_select %p202, %s22, 1
        %p204 = scmp.lt.s32.totalorder %s201, 1
        %s205 = scalar_select %p204, %s201, 1
        %s206 = smul.addr %s203, 2
        %s207 = sadd.s32 %s205, %s206
        %s208 = smul.addr %s207, 8
        %s209 = scalar_lea.vmem %s2, %s208
        %p210 = pneg %p100
        %p211 = pneg %p97
        %p212 = pneg %p128
        %p213 = pneg %p125
        %s214 = sand.u32 %s115, 1
        %s215 = scalar_lea.sflag [#allocation4], %s214
        %s216 = sand.u32 %s115, 1
        %s217 = smul.addr %s216, 16
        %s218 = scalar_lea.vmem [#allocation5], %s217
        %p219 = scmp.lt.s32.totalorder %s22, 1
        %s220 = scalar_select %p219, %s22, 1
        %s221 = smul.addr %s220, 3
        %s222 = smul.addr %s221, 8
        %s223 = scalar_lea.vmem %s0, %s222
        %s224 = smul.u32 2, %s23
        %p225 = scmp.lt.s32.totalorder %s22, 1
        %s226 = scalar_select %p225, %s22, 1
        %p227 = scmp.lt.s32.totalorder %s224, 1
        %s228 = scalar_select %p227, %s224, 1
        %s229 = smul.addr %s226, 2
        %s230 = sadd.s32 %s228, %s229
        %s231 = smul.addr %s230, 8
        %s232 = scalar_lea.vmem %s2, %s231
        %s233 = smul.u32 2, %s23
        %s234 = smul.u32 2, %s23
        %s235 = smul.u32 %s23, 16
        %s236 = scalar_lea.vmem %s223, %s235
        %v237 = vld [vmem:[%s236] sm:$0xff]
        %v238 = vld [vmem:[%s236 + $0x8] sm:$0xff]
        %v239 = vld [vmem:[#allocation2] sm:$0xff]
        %v240 = vld [vmem:[#allocation2 + $0x8] sm:$0xff]
        %v241 = vld [vmem:[#allocation2 + $0x10] sm:$0xff]
        %v242 = vld [vmem:[#allocation2 + $0x18] sm:$0xff]
        %v243 = vld [vmem:[#allocation2 + $0x20] sm:$0x1f]
        %s244 = sadd.s32 %s235, 1
        %s245 = scalar_lea.vmem %s223, %s244
        %v246 = vld [vmem:[%s245] sm:$0xff]
        %v247 = vld [vmem:[%s245 + $0x8] sm:$0xff]
        %s248 = scalar_lea.vmem [#allocation2], 40
        %v249 = vld [vmem:[%s248] sm:$0xff]
        %v250 = vld [vmem:[%s248 + $0x8] sm:$0xff]
        %v251 = vld [vmem:[%s248 + $0x10] sm:$0xff]
        %v252 = vld [vmem:[%s248 + $0x18] sm:$0xff]
        %v253 = vld [vmem:[%s248 + $0x20] sm:$0x1f]
        %vm254 = vcmask 302080
        %v256 = vsel %vm254, %v246, 0
        %v259 = vsel %vm254, %v247, 0
        %vm261 = vcmask 1044480
        %v263 = vsel %vm261, %v253, 0
        %265 = vmatprep.subr.mxu0 0.0
        %266 = vmatpush1.msra.mxu0 0.0
        %267 = vmatprep.subr.mxu0 0.0
        %268 = vmatpush1.msra.mxu0 0.0
        %269 = vmatprep.subr.mxu0 0.0
        %270 = vmatpush1.msra.mxu0 0.0
        %271 = vmatprep.subr.mxu0 0.0
        %272 = vmatpush1.msra.mxu0 0.0
        %273 = vmatprep.subr.mxu0 0.0
        %274 = vmatpush1.msra.mxu0 0.0
        %275 = vmatprep.subr.mxu0 0.0
        %276 = vmatpush1.msra.mxu0 0.0
        %277 = vmatprep.subr.mxu0 0.0
        %278 = vmatpush1.msra.mxu0 0.0
        %279 = vmatprep.subr.mxu0 0.0
        %280 = vmatpush1.msra.mxu0 0.0
        %281 = vmatprep.subr.mxu0 0.0
        %282 = vmatpush1.msra.mxu0 0.0
        %283 = vmatprep.subr.mxu0 0.0
        %284 = vmatpush1.msra.mxu0 0.0
        %285 = vmatprep.subr.mxu0 0.0
        %286 = vmatpush1.msra.mxu0 0.0
        %287 = vmatprep.subr.mxu0 0.0
        %288 = vmatpush1.msra.mxu0 %v263
        %289 = vmatprep.subr.mxu0 0.0
        %290 = vmatpush1.msra.mxu0 %v252
        %291 = vmatprep.subr.mxu0 0.0
        %292 = vmatpush1.msra.mxu0 %v251
        %293 = vmatprep.subr.mxu0 0.0
        %294 = vmatpush1.msra.mxu0 %v250
        %295 = vmatprep.subr.mxu0 0.0
        %296 = vmatpush1.msra.mxu0 %v249
        %297 = vmatprep.subr.mxu0 0.0
        %298 = vmatpush2.msra.mxu0 0.0
        %299 = vmatprep.subr.mxu0 0.0
        %300 = vmatpush2.msra.mxu0 0.0
        %301 = vmatprep.subr.mxu0 0.0
        %302 = vmatpush2.msra.mxu0 0.0
        %303 = vmatprep.subr.mxu0 0.0
        %304 = vmatpush2.msra.mxu0 0.0
        %305 = vmatprep.subr.mxu0 0.0
        %306 = vmatpush2.msra.mxu0 0.0
        %307 = vmatprep.subr.mxu0 0.0
        %308 = vmatpush2.msra.mxu0 0.0
        %309 = vmatprep.subr.mxu0 0.0
        %310 = vmatpush2.msra.mxu0 0.0
        %311 = vmatprep.subr.mxu0 0.0
        %312 = vmatpush2.msra.mxu0 0.0
        %313 = vmatprep.subr.mxu0 0.0
        %314 = vmatpush2.msra.mxu0 0.0
        %315 = vmatprep.subr.mxu0 0.0
        %316 = vmatpush2.msra.mxu0 0.0
        %317 = vmatprep.subr.mxu0 0.0
        %318 = vmatpush2.msra.mxu0 0.0
        %319 = vmatprep.subr.mxu0 0.0
        %320 = vmatpush2.msra.mxu0 0.0
        %321 = vmatprep.subr.mxu0 0.0
        %322 = vmatpush2.msra.mxu0 0.0
        %323 = vmatprep.subr.mxu0 0.0
        %324 = vmatpush2.msra.mxu0 0.0
        %325 = vmatprep.subr.mxu0 0.0
        %326 = vmatpush2.msra.mxu0 0.0
        %327 = vmatprep.subr.mxu0 0.0
        %328 = vmatpush2.msra.mxu0 0.0
        %329 = vmatprep.mubr.f32.mxu0 0.0
        %330 = vmatmul.mubr.f32.gmra.mxu0 %v256
        %v331 = vpop.f32.mrf.mxu0
        %v332 = vadd.f32 0.0, %v331
        %v333 = vpop.f32.mrf.mxu0
        %334 = vmatprep.mubr.f32.mxu0 0.0
        %335 = vmatmul.mubr.f32.gmra.mxu0 %v259
        %v336 = vpop.f32.mrf.mxu0
        %v337 = vadd.f32 0.0, %v336
        %v338 = vpop.f32.mrf.mxu0
        %339 = vdwg.mxu0
        %v341 = vsel %vm254, %v237, 0
        %v344 = vsel %vm254, %v238, 0
        %v347 = vsel %vm261, %v243, 0
        %349 = vmatprep.subr.mxu0 0.0
        %350 = vmatpush1.msra.mxu0 0.0
        %351 = vmatprep.subr.mxu0 0.0
        %352 = vmatpush1.msra.mxu0 0.0
        %353 = vmatprep.subr.mxu0 0.0
        %354 = vmatpush1.msra.mxu0 0.0
        %355 = vmatprep.subr.mxu0 0.0
        %356 = vmatpush1.msra.mxu0 0.0
        %357 = vmatprep.subr.mxu0 0.0
        %358 = vmatpush1.msra.mxu0 0.0
        %359 = vmatprep.subr.mxu0 0.0
        %360 = vmatpush1.msra.mxu0 0.0
        %361 = vmatprep.subr.mxu0 0.0
        %362 = vmatpush1.msra.mxu0 0.0
        %363 = vmatprep.subr.mxu0 0.0
        %364 = vmatpush1.msra.mxu0 0.0
        %365 = vmatprep.subr.mxu0 0.0
        %366 = vmatpush1.msra.mxu0 0.0
        %367 = vmatprep.subr.mxu0 0.0
        %368 = vmatpush1.msra.mxu0 0.0
        %369 = vmatprep.subr.mxu0 0.0
        %370 = vmatpush1.msra.mxu0 0.0
        %371 = vmatprep.subr.mxu0 0.0
        %372 = vmatpush1.msra.mxu0 %v347
        %373 = vmatprep.subr.mxu0 0.0
        %374 = vmatpush1.msra.mxu0 %v242
        %375 = vmatprep.subr.mxu0 0.0
        %376 = vmatpush1.msra.mxu0 %v241
        %377 = vmatprep.subr.mxu0 0.0
        %378 = vmatpush1.msra.mxu0 %v240
        %379 = vmatprep.subr.mxu0 0.0
        %380 = vmatpush1.msra.mxu0 %v239
        %381 = vmatprep.subr.mxu0 0.0
        %382 = vmatpush2.msra.mxu0 0.0
        %383 = vmatprep.subr.mxu0 0.0
        %384 = vmatpush2.msra.mxu0 0.0
        %385 = vmatprep.subr.mxu0 0.0
        %386 = vmatpush2.msra.mxu0 0.0
        %387 = vmatprep.subr.mxu0 0.0
        %388 = vmatpush2.msra.mxu0 0.0
        %389 = vmatprep.subr.mxu0 0.0
        %390 = vmatpush2.msra.mxu0 0.0
        %391 = vmatprep.subr.mxu0 0.0
        %392 = vmatpush2.msra.mxu0 0.0
        %393 = vmatprep.subr.mxu0 0.0
        %394 = vmatpush2.msra.mxu0 0.0
        %395 = vmatprep.subr.mxu0 0.0
        %396 = vmatpush2.msra.mxu0 0.0
        %397 = vmatprep.subr.mxu0 0.0
        %398 = vmatpush2.msra.mxu0 0.0
        %399 = vmatprep.subr.mxu0 0.0
        %400 = vmatpush2.msra.mxu0 0.0
        %401 = vmatprep.subr.mxu0 0.0
        %402 = vmatpush2.msra.mxu0 0.0
        %403 = vmatprep.subr.mxu0 0.0
        %404 = vmatpush2.msra.mxu0 0.0
        %405 = vmatprep.subr.mxu0 0.0
        %406 = vmatpush2.msra.mxu0 0.0
        %407 = vmatprep.subr.mxu0 0.0
        %408 = vmatpush2.msra.mxu0 0.0
        %409 = vmatprep.subr.mxu0 0.0
        %410 = vmatpush2.msra.mxu0 0.0
        %411 = vmatprep.subr.mxu0 0.0
        %412 = vmatpush2.msra.mxu0 0.0
        %413 = vmatprep.mubr.f32.mxu0 0.0
        %414 = vmatmul.mubr.f32.gmra.mxu0 %v341
        %v415 = vpop.f32.mrf.mxu0
        %v416 = vadd.f32 %v332, %v415
        %v417 = vpop.f32.mrf.mxu0
        %418 = vmatprep.mubr.f32.mxu0 0.0
        %419 = vmatmul.mubr.f32.gmra.mxu0 %v344
        %v420 = vpop.f32.mrf.mxu0
        %v421 = vadd.f32 %v337, %v420
        %v422 = vpop.f32.mrf.mxu0
        %423 = vdwg.mxu0
        %s424 = sadd.s32 %s235, 2
        %s425 = scalar_lea.vmem %s223, %s424
        %v426 = vld [vmem:[%s425] sm:$0xff]
        %v427 = vld [vmem:[%s425 + $0x8] sm:$0xff]
        %s428 = scalar_lea.vmem [#allocation2], 80
        %v429 = vld [vmem:[%s428] sm:$0xff]
        %v430 = vld [vmem:[%s428 + $0x8] sm:$0xff]
        %v431 = vld [vmem:[%s428 + $0x10] sm:$0xff]
        %v432 = vld [vmem:[%s428 + $0x18] sm:$0xff]
        %v433 = vld [vmem:[%s428 + $0x20] sm:$0x1f]
        %v435 = vsel %vm254, %v426, 0
        %v438 = vsel %vm254, %v427, 0
        %v441 = vsel %vm261, %v433, 0
        %443 = vmatprep.subr.mxu0 0.0
        %444 = vmatpush1.msra.mxu0 0.0
        %445 = vmatprep.subr.mxu0 0.0
        %446 = vmatpush1.msra.mxu0 0.0
        %447 = vmatprep.subr.mxu0 0.0
        %448 = vmatpush1.msra.mxu0 0.0
        %449 = vmatprep.subr.mxu0 0.0
        %450 = vmatpush1.msra.mxu0 0.0
        %451 = vmatprep.subr.mxu0 0.0
        %452 = vmatpush1.msra.mxu0 0.0
        %453 = vmatprep.subr.mxu0 0.0
        %454 = vmatpush1.msra.mxu0 0.0
        %455 = vmatprep.subr.mxu0 0.0
        %456 = vmatpush1.msra.mxu0 0.0
        %457 = vmatprep.subr.mxu0 0.0
        %458 = vmatpush1.msra.mxu0 0.0
        %459 = vmatprep.subr.mxu0 0.0
        %460 = vmatpush1.msra.mxu0 0.0
        %461 = vmatprep.subr.mxu0 0.0
        %462 = vmatpush1.msra.mxu0 0.0
        %463 = vmatprep.subr.mxu0 0.0
        %464 = vmatpush1.msra.mxu0 0.0
        %465 = vmatprep.subr.mxu0 0.0
        %466 = vmatpush1.msra.mxu0 %v441
        %467 = vmatprep.subr.mxu0 0.0
        %468 = vmatpush1.msra.mxu0 %v432
        %469 = vmatprep.subr.mxu0 0.0
        %470 = vmatpush1.msra.mxu0 %v431
        %471 = vmatprep.subr.mxu0 0.0
        %472 = vmatpush1.msra.mxu0 %v430
        %473 = vmatprep.subr.mxu0 0.0
        %474 = vmatpush1.msra.mxu0 %v429
        %475 = vmatprep.subr.mxu0 0.0
        %476 = vmatpush2.msra.mxu0 0.0
        %477 = vmatprep.subr.mxu0 0.0
        %478 = vmatpush2.msra.mxu0 0.0
        %479 = vmatprep.subr.mxu0 0.0
        %480 = vmatpush2.msra.mxu0 0.0
        %481 = vmatprep.subr.mxu0 0.0
        %482 = vmatpush2.msra.mxu0 0.0
        %483 = vmatprep.subr.mxu0 0.0
        %484 = vmatpush2.msra.mxu0 0.0
        %485 = vmatprep.subr.mxu0 0.0
        %486 = vmatpush2.msra.mxu0 0.0
        %487 = vmatprep.subr.mxu0 0.0
        %488 = vmatpush2.msra.mxu0 0.0
        %489 = vmatprep.subr.mxu0 0.0
        %490 = vmatpush2.msra.mxu0 0.0
        %491 = vmatprep.subr.mxu0 0.0
        %492 = vmatpush2.msra.mxu0 0.0
        %493 = vmatprep.subr.mxu0 0.0
        %494 = vmatpush2.msra.mxu0 0.0
        %495 = vmatprep.subr.mxu0 0.0
        %496 = vmatpush2.msra.mxu0 0.0
        %497 = vmatprep.subr.mxu0 0.0
        %498 = vmatpush2.msra.mxu0 0.0
        %499 = vmatprep.subr.mxu0 0.0
        %500 = vmatpush2.msra.mxu0 0.0
        %501 = vmatprep.subr.mxu0 0.0
        %502 = vmatpush2.msra.mxu0 0.0
        %503 = vmatprep.subr.mxu0 0.0
        %504 = vmatpush2.msra.mxu0 0.0
        %505 = vmatprep.subr.mxu0 0.0
        %506 = vmatpush2.msra.mxu0 0.0
        %507 = vmatprep.mubr.f32.mxu0 0.0
        %508 = vmatmul.mubr.f32.gmra.mxu0 %v435
        %v509 = vpop.f32.mrf.mxu0
        %v510 = vadd.f32 0.0, %v509
        %v511 = vpop.f32.mrf.mxu0
        %512 = vmatprep.mubr.f32.mxu0 0.0
        %513 = vmatmul.mubr.f32.gmra.mxu0 %v438
        %v514 = vpop.f32.mrf.mxu0
        %v515 = vadd.f32 0.0, %v514
        %v516 = vpop.f32.mrf.mxu0
        %517 = vdwg.mxu0
        %v518 = vadd.f32 %v416, %v510
        %v519 = vadd.f32 %v421, %v515
        %v520 = vlaneseq
        %v521 = vand.u32 %v520, 127
        %vm522 = vcmp.lt.s32.totalorder %v521, 96
        %v523 = vxor.u32 %v518, 2147483648
        %v524 = vxor.u32 %v519, 2147483648
        %v525 = vmul.f32 %v523, 1.442695
        %v526 = vpow.pop %v525
        %v527 = vmul.f32 %v524, 1.442695
        %v528 = vpow.pop %v527
        %v529 = vadd.f32 %v526, 1.0
        %v530 = vadd.f32 %v528, 1.0
        %v531 = vrcp.pop %v529
        %v532 = vmul.f32 1.0, %v531
        %v533 = vrcp.pop %v530
        %v534 = vmul.f32 1.0, %v533
        %v535 = vtanh.pop %v518
        %v536 = vtanh.pop %v519
        %v537 = vsel %vm522, %v532, %v535
        %v538 = vsel %vm522, %v534, %v536
        %539 = vrot.lane.b32.xlu0 %v537, 32
        %v540 = vpop.permute.xlu0 %539
        %541 = vrot.lane.b32.xlu0 %v538, 32
        %v542 = vpop.permute.xlu0 %541
        %v543 = vmul.f32 %v537, %v540
        %v544 = vmul.f32 %v538, %v542
        %545 = vrot.lane.b32.xlu0 %v537, 96
        %v546 = vpop.permute.xlu0 %545
        %547 = vrot.lane.b32.xlu0 %v538, 96
        %v548 = vpop.permute.xlu0 %547
        %549 = vrot.lane.b32.xlu0 %v537, 64
        %v550 = vpop.permute.xlu0 %549
        %551 = vrot.lane.b32.xlu0 %v538, 64
        %v552 = vpop.permute.xlu0 %551
        %v553 = vld [vmem:[%s232] sm:$0xff]
        %v554 = vld [vmem:[%s232 + $0x8] sm:$0xff]
        %vm555 = vcmask 261120
        %v556 = vsel %vm555, %v553, 0.0
        %v557 = vsel %vm555, %v554, 0.0
        %v558 = vmul.f32 %v546, %v556
        %v559 = vmul.f32 %v548, %v557
        %v560 = vadd.f32 %v558, %v543
        %v561 = vadd.f32 %v559, %v544
        %v562 = vtanh.pop %v560
        %v563 = vtanh.pop %v561
        %v564 = vmul.f32 %v550, %v562
        %v565 = vmul.f32 %v552, %v563
        %vm566 = vcmp.lt.s32.totalorder %v521, 32
        %v567 = vsel %vm566, %v564, 0.0
        %v568 = vsel %vm566, %v565, 0.0
        %vm569 = vcmp.ge.s32.totalorder %v521, 32
        %vm570 = vcmp.lt.s32.totalorder %v521, 64
        %vm571 = vmand %vm569, %vm570
        %572 = vrot.lane.b32.xlu0 %v560, 32
        %v573 = vpop.permute.xlu0 %572
        %574 = vrot.lane.b32.xlu0 %v561, 32
        %v575 = vpop.permute.xlu0 %574
        %v576 = vsel %vm571, %v573, 0.0
        %v577 = vsel %vm571, %v575, 0.0
        %v578 = vadd.f32 %v567, %v576
        %v579 = vadd.f32 %v568, %v577
        %580 = vst [vmem:[%s218] sm:$0xff] %v578
        %581 = vst [vmem:[%s218 + $0x8] sm:$0xff] %v579
        %s582 = sand.u32 %s115, 1
        %s583 = scalar_lea.sflag [#allocation4], %s582
        %s584 = sand.u32 %s115, 1
        %s585 = smul.addr %s584, 16
        %s586 = scalar_lea.vmem [#allocation5], %s585
        // Predicated region
        $region37: #{tpu_custom_call.1} parent=31 // pred_check
          %p587 = pneg %p125
        $region38: #{tpu_custom_call.1} parent=31 // pred_check_branch
          %589 = sbr.rel (%p587) target = $region40
        $region39: #{tpu_custom_call.1} parent=31 // pred_region
          %s590 = smul.u32 2, %s23
          %s592 = ssub.s32 256, 256
          %593 = vsyncadd %s583, %s592
          %s594 = smul.addr %s22, 2
          %s595 = sadd.s32 %s590, %s594
          %s596 = smul.addr %s595, 128
          %s597 = scalar_lea.hbm %s3, %s596
          %s598 = sshll.u32 %s586, 4
          %s599 = int_to_ptr.vmem [resolvable:$true] %s598
          %604 = dma.vmem_to_hbm [thread:$0]  %s599, 256, %s597, %s583, 128, 128, 8
        $region40: #{tpu_custom_call.1} parent=31 // pred_fallthru
          _
      $region32: #{tpu_custom_call.1} parent=5 // pred_fallthru
        _
      %p605 = scmp.le.s32.totalorder 2, %s13
      // Predicated region
      $region41: #{tpu_custom_call.1} parent=5 // pred_check
        %p606 = pneg %p605
      $region42: #{tpu_custom_call.1} parent=5 // pred_check_branch
        %608 = sbr.rel (%p606) target = $region44
      $region43: #{tpu_custom_call.1} parent=5 // pred_region
        %s609 = ssub.s32 %s13, 2
        // Predicated region
        $region45: #{tpu_custom_call.1} parent=43 // pred_check
          %p610 = pneg %p131
        $region46: #{tpu_custom_call.1} parent=43 // pred_check_branch
          %612 = sbr.rel (%p610) target = $region48
        $region47: #{tpu_custom_call.1} parent=43 // pred_region
          %s613 = sand.u32 %s116, 1
          %s614 = scalar_lea.sflag [#allocation4], %s613
          %s615 = sand.u32 %s116, 1
          %s616 = smul.addr %s615, 16
          %s617 = scalar_lea.vmem [#allocation5], %s616
          %618 = dma.done %s614, 256
        $region48: #{tpu_custom_call.1} parent=43 // pred_fallthru
          _
      $region44: #{tpu_custom_call.1} parent=5 // pred_fallthru
        _
    $region6: #{tpu_custom_call.1} parent=1 // loop_footer
      %s17 = sadd.s32 1, %s13
    $region7: #{tpu_custom_call.1} parent=1 // loop_footer_branch
      %12 = sbr.rel target = $region3
    $region8: #{tpu_custom_call.1} parent=1 // loop_exit
      _
    %619 = vsyncpa [#allocation3], 1
    %s620 = scalar_lea.sflag [#allocation3], 1
    %621 = vsyncpa %s620, 1
    %622 = vsyncpa [#allocation4], 1
    %s623 = scalar_lea.sflag [#allocation4], 1
    %624 = vsyncpa %s623, 1

</llo_original>
